<compile_context>
chip_gen: v7x
topology: tpu7x:2x2x1
jax: 0.10.0
libtpu: 0.0.40
codegen_flags: <defaults>
</compile_context>

<pallas_src>
import functools

import jax
import jax.numpy as jnp
from jax import lax
from jax.experimental import pallas as pl
from jax.experimental.pallas import tpu as pltpu


def _round_up(x: int, m: int) -> int:
    return (x + m - 1) // m * m


def _cdiv(a: int, b: int) -> int:
    return -(-a // b)


def _default_vmem_limit_bytes() -> int:
    # v5e/v6e: 128 MiB physical -> 96 MiB scoped; v7x: 64 MiB physical -> 48 MiB.
    try:
        cap = pltpu.get_tpu_info().vmem_capacity_bytes
    except Exception:
        cap = 128 * 1024 * 1024
    return int(min(cap * 3 // 4, 96 * 1024 * 1024))


def _softmax_neg(att):
    """softmax(rowmax(G) - G) == exp(rowmin(G) - G) / sum  (single cross-lane reduce)."""
    row_min = jnp.min(att, axis=-1, keepdims=True)
    e = jnp.exp(row_min - att)
    # Exact divide (NOT the approx EUP reciprocal): the denominator is only a (rows, 1)
    # vector computed once per batch element, so exactness is essentially free.
    return e / jnp.sum(e, axis=-1, keepdims=True)


# -----------------------------------------------------------------------------
# Fused single-pass kernel: whole (C, HW_p) slab resident, x read from HBM once.
# -----------------------------------------------------------------------------
def _cam_fused_kernel(beta_ref, x_ref, o_ref):
    feat = x_ref[...]                                           # (C, HW_p), input dtype
    gram = lax.dot_general(                                     # feat @ feat^T, f32 acc
        feat, feat,
        dimension_numbers=(((1,), (1,)), ((), ())),
        preferred_element_type=jnp.float32,
    )
    p = _softmax_neg(gram).astype(feat.dtype)                   # feed MXU in input dtype
    feat_e = jnp.dot(p, feat, preferred_element_type=jnp.float32)
    o_ref[...] = (beta_ref[0] * feat_e + feat.astype(jnp.float32)).astype(o_ref.dtype)


# -----------------------------------------------------------------------------
# Two-pass phase 1: attention = softmax(rowmax(G) - G), G = feat @ feat^T, tiled HW.
# -----------------------------------------------------------------------------
def _cam_attention_kernel(x_ref, p_ref, acc_ref):
    k = pl.program_id(1)

    @pl.when(k == 0)
    def _():
        acc_ref[...] = jnp.zeros_like(acc_ref)

    feat = x_ref[...]                                           # (C, TK)
    acc_ref[...] += lax.dot_general(
        feat, feat,
        dimension_numbers=(((1,), (1,)), ((), ())),
        preferred_element_type=jnp.float32,
    )

    @pl.when(k == pl.num_programs(1) - 1)
    def _():
        p_ref[...] = _softmax_neg(acc_ref[...]).astype(p_ref.dtype)


def _cam_attention_rowblock_kernel(xr_ref, xa_ref, p_ref, acc_ref):
    """Gram-row-blocked variant: grid=(B, C/c_blk, HW/TK); fills both TCs at B == 1."""
    k = pl.program_id(2)

    @pl.when(k == 0)
    def _():
        acc_ref[...] = jnp.zeros_like(acc_ref)

    acc_ref[...] += lax.dot_general(                            # (c_blk, TK) @ (C, TK)^T
        xr_ref[...], xa_ref[...],
        dimension_numbers=(((1,), (1,)), ((), ())),
        preferred_element_type=jnp.float32,
    )

    @pl.when(k == pl.num_programs(2) - 1)
    def _():
        p_ref[...] = _softmax_neg(acc_ref[...]).astype(p_ref.dtype)


# -----------------------------------------------------------------------------
# Two-pass phase 2: out = beta * (P @ feat) + feat, streamed over HW output tiles.
# -----------------------------------------------------------------------------
def _cam_apply_kernel(beta_ref, p_ref, x_ref, o_ref):
    feat = x_ref[...]                                           # (C, TN), input dtype
    feat_e = jnp.dot(p_ref[...], feat, preferred_element_type=jnp.float32)
    o_ref[...] = (beta_ref[0] * feat_e + feat.astype(jnp.float32)).astype(o_ref.dtype)


def cam_forward(x, beta, *, max_hw_tile=None, tile_hw=None, vmem_limit_bytes=None,
                min_pallas_channels=128, fuse=None):
    """Pallas _CAM forward.  x: (B, C, H, W); beta: (1,) learnable scalar."""
    B, C, H, W = x.shape
    HW = H * W

    if C < min_pallas_channels:
        # Small-C fallback: XLA's einsum beats the hand-written kernel here.
        return cam_reference(x, beta)

    itemsize = jnp.dtype(x.dtype).itemsize
    if vmem_limit_bytes is None:
        vmem_limit_bytes = _default_vmem_limit_bytes()

    x_flat = x.reshape(B, C, HW)

    # ---------------- Fused single-pass path (slab fits VMEM). ----------------
    hw_full = _round_up(HW, 128)
    slab = C * hw_full * itemsize
    # in + out double-buffered (4x slab) + gram/softmax/P intermediates + slack.
    fused_bytes = 4 * slab + 6 * C * C * 4 + (2 << 20)
    if fuse is None:
        fuse = fused_bytes <= vmem_limit_bytes

    if fuse:
        if hw_full != HW:
            x_flat = jnp.pad(x_flat, ((0, 0), (0, 0), (0, hw_full - HW)))
        out_flat = pl.pallas_call(
            _cam_fused_kernel,
            out_shape=jax.ShapeDtypeStruct((B, C, hw_full), x.dtype),
            grid_spec=pltpu.PrefetchScalarGridSpec(
                num_scalar_prefetch=0,
                grid=(B,),
                in_specs=[
                    pl.BlockSpec(memory_space=pltpu.MemorySpace.SMEM),          # beta (1,)
                    pl.BlockSpec((pl.Squeezed(), C, hw_full), lambda b: (b, 0, 0)),
                ],
                out_specs=pl.BlockSpec((pl.Squeezed(), C, hw_full), lambda b: (b, 0, 0)),
            ),
            compiler_params=pltpu.CompilerParams(
                dimension_semantics=("parallel",),
                vmem_limit_bytes=vmem_limit_bytes,
            ),
            cost_estimate=pl.CostEstimate(
                flops=4 * B * C * C * hw_full + 3 * B * C * hw_full,
                transcendentals=B * C * C,
                bytes_accessed=2 * B * C * hw_full * itemsize,
            ),
        )(beta, x_flat)
        if hw_full != HW:
            out_flat = out_flat[:, :, :HW]
        return out_flat.reshape(B, C, H, W)

    # ---------------- Two-pass streamed path. ----------------
    if max_hw_tile is None:
        # Phase-2 per-step working set ~ 4*C*tile_hw*itemsize (double-buffered in+out)
        # + 2*C*C*itemsize (P); keep it around half of the scoped limit.
        budget = vmem_limit_bytes // 2 - 2 * C * C * itemsize
        max_hw_tile = max(256, min(8192, budget // max(1, 4 * C * itemsize)))

    if tile_hw is None:
        # Minimize HW zero-padding: fix the number of HW tiles first, then take the
        # smallest 128-aligned tile that covers HW in that many steps.
        num_k = max(1, _cdiv(HW, max_hw_tile))
        tile_hw = _round_up(_cdiv(HW, num_k), 128)
    else:
        tile_hw = _round_up(tile_hw, 128)
        num_k = max(1, _cdiv(HW, tile_hw))
    HW_p = tile_hw * num_k

    if HW_p != HW:
        # Zero columns contribute nothing to feat @ feat^T and are sliced off at the end.
        x_flat = jnp.pad(x_flat, ((0, 0), (0, 0), (0, HW_p - HW)))

    # ---- Phase 1: C x C softmaxed attention per batch element (P in input dtype). ----
    c_blk = C
    if B == 1 and C >= 256:
        for cb in (256, 128):
            if C % cb == 0 and cb < C:
                c_blk = cb
                break
    num_r = C // c_blk

    common_cost = pl.CostEstimate(
        flops=2 * B * C * C * HW_p * max(1, num_r) // max(1, num_r),  # per-grid total
        transcendentals=B * C * C,
        bytes_accessed=(1 + num_r) * B * C * HW_p * itemsize // 2 * 2
        + B * C * C * itemsize,
    )

    if num_r > 1:
        p_att = pl.pallas_call(
            _cam_attention_rowblock_kernel,
            out_shape=jax.ShapeDtypeStruct((B, C, C), x.dtype),
            grid_spec=pltpu.PrefetchScalarGridSpec(
                num_scalar_prefetch=0,
                grid=(B, num_r, num_k),
                in_specs=[
                    pl.BlockSpec((pl.Squeezed(), c_blk, tile_hw),
                                 lambda b, r, k: (b, r, k)),
                    pl.BlockSpec((pl.Squeezed(), C, tile_hw),
                                 lambda b, r, k: (b, 0, k)),
                ],
                out_specs=pl.BlockSpec((pl.Squeezed(), c_blk, C),
                                       lambda b, r, k: (b, r, 0)),
                scratch_shapes=[pltpu.VMEM((c_blk, C), jnp.float32)],
            ),
            compiler_params=pltpu.CompilerParams(
                dimension_semantics=("parallel", "parallel", "arbitrary"),
                vmem_limit_bytes=vmem_limit_bytes,
            ),
            cost_estimate=common_cost,
        )(x_flat, x_flat)
    else:
        p_att = pl.pallas_call(
            _cam_attention_kernel,
            out_shape=jax.ShapeDtypeStruct((B, C, C), x.dtype),
            grid_spec=pltpu.PrefetchScalarGridSpec(
                num_scalar_prefetch=0,
                grid=(B, num_k),
                in_specs=[
                    pl.BlockSpec((pl.Squeezed(), C, tile_hw), lambda b, k: (b, 0, k)),
                ],
                out_specs=pl.BlockSpec((pl.Squeezed(), C, C), lambda b, k: (b, 0, 0)),
                scratch_shapes=[pltpu.VMEM((C, C), jnp.float32)],
            ),
            compiler_params=pltpu.CompilerParams(
                dimension_semantics=("parallel", "arbitrary"),
                vmem_limit_bytes=vmem_limit_bytes,
            ),
            cost_estimate=common_cost,
        )(x_flat)

    # ---- Phase 2: out = beta * (P @ feat) + feat, lane-dense output tiles. ----
    out_flat = pl.pallas_call(
        _cam_apply_kernel,
        out_shape=jax.ShapeDtypeStruct((B, C, HW_p), x.dtype),
        grid_spec=pltpu.PrefetchScalarGridSpec(
            num_scalar_prefetch=0,
            grid=(B, num_k),
            in_specs=[
                pl.BlockSpec(memory_space=pltpu.MemorySpace.SMEM),              # beta (1,)
                pl.BlockSpec((pl.Squeezed(), C, C), lambda b, n: (b, 0, 0)),
                pl.BlockSpec((pl.Squeezed(), C, tile_hw), lambda b, n: (b, 0, n)),
            ],
            out_specs=pl.BlockSpec((pl.Squeezed(), C, tile_hw), lambda b, n: (b, 0, n)),
        ),
        compiler_params=pltpu.CompilerParams(
            dimension_semantics=("parallel", "parallel"),
            vmem_limit_bytes=vmem_limit_bytes,
        ),
        cost_estimate=pl.CostEstimate(
            flops=2 * B * C * C * HW_p + 3 * B * C * HW_p,
            transcendentals=0,
            bytes_accessed=2 * B * C * HW_p * itemsize + B * C * C * itemsize,
        ),
    )(beta, p_att, x_flat)

    if HW_p != HW:
        out_flat = out_flat[:, :, :HW]
    return out_flat.reshape(B, C, H, W)


def cam_reference(x, beta):
    """Pure-JAX reference matching the PyTorch _CAM module exactly."""
    B, C, H, W = x.shape
    feat_a = x.reshape(B, C, H * W)
    attention = jnp.einsum("bcn,bdn->bcd", feat_a, feat_a)
    attention_new = jnp.max(attention, axis=-1, keepdims=True) - attention
    attention = jax.nn.softmax(attention_new, axis=-1)
    feat_e = jnp.einsum("bcd,bdn->bcn", attention, feat_a).reshape(B, C, H, W)
    return beta[0] * feat_e + x


# -----------------------------------------------------------------------------
# _DAHead glue (plain JAX): 3x3/1x1 convs, BatchNorm (eval mode), ReLU, _PAM.
# These dense conv/elementwise ops are left to XLA; only the _CAM attention core
# is a hand-written Pallas kernel.
# TODO(synk): a production _PAM (HW x HW spatial attention) needs a
#             flash-attention-style tiled Pallas kernel; kept in plain JAX here.
# -----------------------------------------------------------------------------
def _conv2d(x, w, pad):
    return lax.conv_general_dilated(
        x, w, window_strides=(1, 1), padding=pad,
        dimension_numbers=("NCHW", "OIHW", "NCHW"))


def _bn_eval(x, gamma, bias, mean, var, eps=1e-5):
    inv = gamma * lax.rsqrt(var + eps)
    return x * inv[None, :, None, None] + (bias - mean * inv)[None, :, None, None]


def _conv_bn_relu(x, p, pad):
    y = _conv2d(x, p["w"], pad)
    y = _bn_eval(y, p["gamma"], p["bias"], p["mean"], p["var"])
    return jnp.maximum(y, 0.0)


def _pam_forward(x, p):
    """Position attention module (plain JAX, matches the PyTorch _PAM forward)."""
    B, C, H, W = x.shape
    HW = H * W
    pad1 = ((0, 0), (0, 0))
    fb = (_conv2d(x, p["wb"], pad1) + p["bb"][None, :, None, None]).reshape(B, -1, HW)
    fc = (_conv2d(x, p["wc"], pad1) + p["bc"][None, :, None, None]).reshape(B, -1, HW)
    fd = (_conv2d(x, p["wd"], pad1) + p["bd"][None, :, None, None]).reshape(B, -1, HW)
    att = jax.nn.softmax(jnp.einsum("bcn,bcm->bnm", fb, fc), axis=-1)   # (B, HW, HW)
    fe = jnp.einsum("bcm,bnm->bcn", fd, att).reshape(B, C, H, W)
    return p["alpha"][0] * fe + x


def dahead_forward(x, params, cam_fn):
    """Forward pass of the PyTorch _DAHead module (BatchNorm in eval mode)."""
    pad3 = ((1, 1), (1, 1))
    pad1 = ((0, 0), (0, 0))
    feat_p = _conv_bn_relu(x, params["conv_p1"], pad3)
    feat_p = _pam_forward(feat_p, params["pam"])
    feat_p = _conv_bn_relu(feat_p, params["conv_p2"], pad3)
    feat_c = _conv_bn_relu(x, params["conv_c1"], pad3)
    feat_c = cam_fn(feat_c, params["cam_beta"])
    feat_c = _conv_bn_relu(feat_c, params["conv_c2"], pad3)
    feat_fusion = feat_p + feat_c
    return _conv_bn_relu(feat_fusion, params["conv_out"], pad1)


def init_dahead_params(key, in_channels):
    inter = in_channels // 4
    red = inter // 8                      # _PAM reduceRate = 8
    assert red >= 1, "in_channels must be >= 32 for the _PAM 1x1 convs"

    def conv_block(k, cin, cout, ksize):
        scale = 1.0 / (cin * ksize * ksize) ** 0.5
        return dict(
            w=scale * jax.random.normal(k, (cout, cin, ksize, ksize), jnp.float32),
            gamma=jnp.ones((cout,), jnp.float32),   # fresh BatchNorm2d (eval mode)
            bias=jnp.zeros((cout,), jnp.float32),
            mean=jnp.zeros((cout,), jnp.float32),
            var=jnp.ones((cout,), jnp.float32),
        )

    ks = jax.random.split(key, 11)
    pam = dict(
        wb=(1.0 / inter ** 0.5) * jax.random.normal(ks[5], (red, inter, 1, 1), jnp.float32),
        bb=0.1 * jax.random.normal(ks[6], (red,), jnp.float32),
        wc=(1.0 / inter ** 0.5) * jax.random.normal(ks[7], (red, inter, 1, 1), jnp.float32),
        bc=0.1 * jax.random.normal(ks[8], (red,), jnp.float32),
        wd=(1.0 / inter ** 0.5) * jax.random.normal(ks[9], (inter, inter, 1, 1), jnp.float32),
        bd=0.1 * jax.random.normal(ks[10], (inter,), jnp.float32),
        # alpha/beta are zero-initialized nn.Parameters in PyTorch; nonzero values are
        # used in this test so the attention branches actually contribute.
        alpha=jnp.array([0.3], jnp.float32),
    )
    return dict(
        conv_p1=conv_block(ks[0], in_channels, inter, 3),
        conv_c1=conv_block(ks[1], in_channels, inter, 3),
        conv_p2=conv_block(ks[2], inter, in_channels, 3),
        conv_c2=conv_block(ks[3], inter, in_channels, 3),
        conv_out=conv_block(ks[4], in_channels, in_channels, 1),
        pam=pam,
        cam_beta=jnp.array([0.7], jnp.float32),
    )


if __name__ == "__main__":
    key = jax.random.PRNGKey(0)
    k1, k2, k3, k4, k5, k_x, k_par = jax.random.split(key, 7)

    # ---- Unit tests of the CAM Pallas paths vs the pure-JAX reference. ----
    beta = jnp.array([0.7], jnp.float32)
    cam_cases = [
        # tiny C, forced onto the fused single-pass Pallas kernel
        (k1, (2, 4, 16, 16), dict(min_pallas_channels=1)),
        # multi-step HW reduction through the two-pass streamed kernels
        (k2, (2, 16, 16, 16), dict(min_pallas_channels=1, fuse=False, tile_hw=128)),
        # HW = 100 -> zero-padded to 128, fused path
        (k3, (1, 8, 10, 10), dict(min_pallas_channels=1)),
        # B = 1, C = 256: two-pass with the row-blocked phase-1 kernel (v7x megacore)
        (k4, (1, 256, 8, 8), dict(fuse=False, tile_hw=128)),
        # small-C default dispatch -> XLA fallback path
        (k5, (2, 8, 12, 12), {}),
    ]
    for kk, shape, kwargs in cam_cases:
        xc = jax.random.normal(kk, shape, dtype=jnp.float32)
        out_c = jax.block_until_ready(cam_forward(xc, beta, **kwargs))
        ref_c = cam_reference(xc, beta)
        assert out_c.shape == shape
        assert jnp.allclose(out_c, ref_c, atol=2e-2, rtol=2e-2), (
            shape, float(jnp.max(jnp.abs(out_c - ref_c))))

    # ---- Full _DAHead forward with the Pallas CAM kernel inside. ----
    B, in_channels, H, W = 2, 32, 16, 16   # in_channels >= 32 so _PAM has >=1 channel
    x = jax.random.normal(k_x, (B, in_channels, H, W), dtype=jnp.float32)
    params = init_dahead_params(k_par, in_channels)

    cam_pallas = functools.partial(cam_forward, min_pallas_channels=1)
    out = jax.block_until_ready(dahead_forward(x, params, cam_pallas))
    ref = dahead_forward(x, params, cam_reference)
    assert out.shape == (B, in_channels, H, W)
    assert jnp.allclose(out, ref, atol=3e-2, rtol=2e-2), float(
        jnp.max(jnp.abs(out - ref)))

    print("KERNEL_OK")
</pallas_src>

<mosaic_0001>
module attributes {stable_mosaic.version = 11 : i64} {
  func.func @_cam_fused_kernel(%arg0: i32, %arg1: memref<1xf32, #tpu.memory_space<smem>>, %arg2: memref<1x4x256xf32, #tpu.memory_space<vmem>>, %arg3: memref<1x4x256xf32, #tpu.memory_space<vmem>>) attributes {dimension_semantics = [#tpu.dimension_semantics<parallel>], iteration_bounds = array<i64: 2>, scalar_prefetch = 0 : i64, scratch_operands = 0 : i64, tpu.core_type = #tpu.core_type<tc>, window_params = [{transform_indices = @transform_0, window_bounds = array<i64: 1>}, {transform_indices = @transform_1, window_bounds = array<i64: 1, 4, 256>}, {transform_indices = @transform_2, window_bounds = array<i64: 1, 4, 256>}]} {
    %c0 = arith.constant 0 : index
    %c0_0 = arith.constant 0 : index
    %c0_1 = arith.constant 0 : index
    %0 = vector.load %arg2[%c0, %c0_0, %c0_1] : memref<1x4x256xf32, #tpu.memory_space<vmem>>, vector<1x4x256xf32>
    %1 = vector.shape_cast %0 : vector<1x4x256xf32> to vector<4x256xf32>
    %cst = arith.constant dense<0.000000e+00> : vector<4x4xf32>
    %2 = tpu.matmul %1, %1, %cst {dimension_numbers = #tpu.dot_dimension_numbers<[1], [1], [0], [0], [0, 0, 1, 0], [], []>} : vector<4x256xf32>, vector<4x256xf32>, vector<4x4xf32> -> vector<4x4xf32>
    %cst_2 = arith.constant dense<0x7F800000> : vector<4xf32>
    %3 = vector.multi_reduction <minimumf>, %2, %cst_2 [1] : vector<4x4xf32> to vector<4xf32>
    %4 = vector.shape_cast %3 : vector<4xf32> to vector<4x1xf32>
    %5 = vector.broadcast %4 : vector<4x1xf32> to vector<4x4xf32>
    %6 = arith.subf %5, %2 : vector<4x4xf32>
    %7 = math.exp %6 : vector<4x4xf32>
    %cst_3 = arith.constant dense<0.000000e+00> : vector<4xf32>
    %8 = vector.multi_reduction <add>, %7, %cst_3 [1] : vector<4x4xf32> to vector<4xf32>
    %9 = vector.shape_cast %8 : vector<4xf32> to vector<4x1xf32>
    %10 = vector.broadcast %9 : vector<4x1xf32> to vector<4x4xf32>
    %11 = arith.divf %7, %10 : vector<4x4xf32>
    %cst_4 = arith.constant dense<0.000000e+00> : vector<4x256xf32>
    %12 = tpu.matmul %11, %1, %cst_4 {dimension_numbers = #tpu.dot_dimension_numbers<[1], [0], [0], [1], [0, 0, 1, 1], [], []>} : vector<4x4xf32>, vector<4x256xf32>, vector<4x256xf32> -> vector<4x256xf32>
    %c0_5 = arith.constant 0 : index
    %13 = memref.load %arg1[%c0_5] : memref<1xf32, #tpu.memory_space<smem>>
    %14 = vector.broadcast %13 : f32 to vector<4x256xf32>
    %15 = arith.mulf %14, %12 : vector<4x256xf32>
    %16 = arith.addf %15, %1 : vector<4x256xf32>
    %c0_6 = arith.constant 0 : index
    %c0_7 = arith.constant 0 : index
    %c0_8 = arith.constant 0 : index
    %17 = vector.load %arg3[%c0_6, %c0_7, %c0_8] : memref<1x4x256xf32, #tpu.memory_space<vmem>>, vector<1x4x256xf32>
    %18 = vector.shape_cast %17 : vector<1x4x256xf32> to vector<4x256xf32>
    %19 = vector.shape_cast %16 : vector<4x256xf32> to vector<1x4x256xf32>
    tpu.vector_store %arg3[%c0_6, %c0_7, %c0_8], %19 {strides = array<i32>} : memref<1x4x256xf32, #tpu.memory_space<vmem>>, vector<1x4x256xf32>,
    return
  }
  func.func @transform_0(%arg0: i32) -> i32 {
    %c0_i32 = arith.constant 0 : i32
    %c0_i32_0 = arith.constant 0 : i32
    return %c0_i32 : i32
  }
  func.func @transform_1(%arg0: i32) -> (i32, i32, i32) {
    %c0_i32 = arith.constant 0 : i32
    %c0_i32_0 = arith.constant 0 : i32
    %c0_i32_1 = arith.constant 0 : i32
    return %arg0, %c0_i32, %c0_i32_0 : i32, i32, i32
  }
  func.func @transform_2(%arg0: i32) -> (i32, i32, i32) {
    %c0_i32 = arith.constant 0 : i32
    %c0_i32_0 = arith.constant 0 : i32
    %c0_i32_1 = arith.constant 0 : i32
    return %arg0, %c0_i32, %c0_i32_0 : i32, i32, i32
  }
}

</mosaic_0001>

<llo_original>
// kernel: tpu_custom_call.1
$region0: #{tpu_custom_call.1}
  #allocation0 [shape = 'u32[]', space=smem, size = 0x4, offset = 0x4, fixed_abs, tag = 'smem constant byte address 0x4 - core index']
  #allocation1 [shape = 'u32[144,128]{1,0:T(1,128)}', space=vmem, size = 0x12000, scoped, tag = 'internal scratch']
  #allocation2 [shape = 'f32[1]{0:T(128)S(6)}', space=smem, size = 0x200, scoped, tag = 'scoped memory for tpu_custom_call.1']
  %s0 = inlined_call_operand.<no memory space> [shape: f32[1], index: 0, kind: input, shape index: {}]
  %s1 = inlined_call_operand.hbm [shape: f32[2,4,256], index: 1, kind: input, shape index: {}]
  %s2 = inlined_call_operand.hbm [shape: f32[2,4,256], index: 2, kind: output, shape index: {}]
  %s3 = sld [smem:[#allocation0]]
  $region45: #{tpu_custom_call.1} parent=0
    _
  %s5 = ssub.s32 1, %s3
  %s6 = scalar_select 0, %s5, %s3
  %7 = sst [smem:[#allocation2]] %s0
  $region1: #{tpu_custom_call.1} parent=0
    #allocation3 [shape = 'u8[8192]{0}', space=vmem, size = 0x2000, scoped, tag = 'input window, operand 1']
    #allocation4 [shape = 's32[2]{0}', space=sflag, size = 0x8, scoped, tag = 'scoped memory for tpu_custom_call.1']
    #allocation5 [shape = 's32[2]{0}', space=sflag, size = 0x8, scoped, tag = 'scoped memory for tpu_custom_call.1']
    #allocation6 [shape = 'u8[8192]{0}', space=vmem, size = 0x2000, scoped, tag = 'output window, operand 0']
    %8 = vsyncpa [#allocation4], 0
    %s9 = scalar_lea.sflag [#allocation4], 1
    %10 = vsyncpa %s9, 0
    %11 = vsyncpa [#allocation5], 0
    %s12 = scalar_lea.sflag [#allocation5], 1
    %13 = vsyncpa %s12, 0
    loop: start=0, step=1, limit=4
    $region2: #{tpu_custom_call.1} parent=1 // loop_pre_header
      _
    $region3: #{tpu_custom_call.1} parent=1 // loop_header
      %s15 = sphi 0, %s19
      %p16 = scmp.ge.s32.totalorder %s15, 4
      %s23 = sphi 0, %s23
      %s25 = sphi 0, %s23
      %s26 = sphi 0, %s25
      %s40 = sphi 0, %s26
      %s46 = sphi 0, %s48
      %s49 = sphi 0, %s46
      %s50 = sphi 0, %s49
      %s66 = sphi 0, %s50
      %s72 = sphi 0, %s74
      %s75 = sphi 0, %s72
      %s76 = sphi 0, %s75
      %s92 = sphi 0, %s76
    $region4: #{tpu_custom_call.1} parent=1 // loop_header_branch
      %18 = sbr.rel (%p16) target = $region8
    $region5: #{tpu_custom_call.1} parent=1 // loop_body
      %s20 = ssub.s32 %s15, 1
      %s21 = ssub.s32 %s15, 2
      %s22 = sadd.s32 %s15, 1
      %s24 = sadd.s32 %s23, 1
      %p27 = scmp.eq.s32.totalorder %s15, 1
      %p28 = scmp.ne.s32.totalorder %s23, %s25
      %p29 = scmp.eq.s32.totalorder %s15, 0
      %p30 = por %p28, %p29
      %p31 = scmp.ne.s32.totalorder %s23, %s25
      %p32 = scmp.eq.s32.totalorder %s20, 1
      %p33 = por %p31, %p32
      %p34 = scmp.ne.s32.totalorder %s25, %s26
      %p35 = scmp.eq.s32.totalorder %s20, 0
      %p36 = por %p34, %p35
      %p37 = scmp.ne.s32.totalorder %s25, %s26
      %p38 = scmp.eq.s32.totalorder %s21, 1
      %p39 = por %p37, %p38
      %p41 = scmp.ne.s32.totalorder %s26, %s40
      %p42 = scmp.eq.s32.totalorder %s21, 0
      %p43 = por %p41, %p42
      %s44 = ssub.s32 %s15, %s22
      %p45 = scmp.eq.s32.totalorder %s44, 0
      %s47 = sadd.s32 %s46, 1
      %s48 = scalar_select %p45, %s46, %s47
      %p51 = pneg %p45
      %p52 = scmp.eq.s32.totalorder %s15, 1
      %p53 = por %p51, %p52
      %p54 = scmp.ne.s32.totalorder %s46, %s49
      %p55 = scmp.eq.s32.totalorder %s15, 0
      %p56 = por %p54, %p55
      %p57 = scmp.ne.s32.totalorder %s46, %s49
      %p58 = scmp.eq.s32.totalorder %s20, 1
      %p59 = por %p57, %p58
      %p60 = scmp.ne.s32.totalorder %s49, %s50
      %p61 = scmp.eq.s32.totalorder %s20, 0
      %p62 = por %p60, %p61
      %p63 = scmp.ne.s32.totalorder %s49, %s50
      %p64 = scmp.eq.s32.totalorder %s21, 1
      %p65 = por %p63, %p64
      %p67 = scmp.ne.s32.totalorder %s50, %s66
      %p68 = scmp.eq.s32.totalorder %s21, 0
      %p69 = por %p67, %p68
      %s70 = ssub.s32 %s15, %s22
      %p71 = scmp.eq.s32.totalorder %s70, 0
      %s73 = sadd.s32 %s72, 1
      %s74 = scalar_select %p71, %s72, %s73
      %p77 = pneg %p71
      %p78 = scmp.eq.s32.totalorder %s15, 1
      %p79 = por %p77, %p78
      %p80 = scmp.ne.s32.totalorder %s72, %s75
      %p81 = scmp.eq.s32.totalorder %s15, 0
      %p82 = por %p80, %p81
      %p83 = scmp.ne.s32.totalorder %s72, %s75
      %p84 = scmp.eq.s32.totalorder %s20, 1
      %p85 = por %p83, %p84
      %p86 = scmp.ne.s32.totalorder %s75, %s76
      %p87 = scmp.eq.s32.totalorder %s20, 0
      %p88 = por %p86, %p87
      %p89 = scmp.ne.s32.totalorder %s75, %s76
      %p90 = scmp.eq.s32.totalorder %s21, 1
      %p91 = por %p89, %p90
      %p93 = scmp.ne.s32.totalorder %s76, %s92
      %p94 = scmp.eq.s32.totalorder %s21, 0
      %p95 = por %p93, %p94
      %p96 = scmp.le.s32.totalorder 1, %s15
      %p97 = scmp.lt.s32.totalorder %s15, 3
      %p98 = pnand %p96, %p97
      %p99 = pneg %p98
      // Predicated region
      $region9: #{tpu_custom_call.1} parent=5 // pred_check
        _
      $region10: #{tpu_custom_call.1} parent=5 // pred_check_branch
        %101 = sbr.rel (%p98) target = $region12
      $region11: #{tpu_custom_call.1} parent=5 // pred_region
        %s102 = ssub.s32 %s15, 1
        // Predicated region
        $region13: #{tpu_custom_call.1} parent=11 // pred_check
          %p103 = pneg %p36
        $region14: #{tpu_custom_call.1} parent=11 // pred_check_branch
          %105 = sbr.rel (%p103) target = $region16
        $region15: #{tpu_custom_call.1} parent=11 // pred_region
          _
        $region16: #{tpu_custom_call.1} parent=11 // pred_fallthru
          _
      $region12: #{tpu_custom_call.1} parent=5 // pred_fallthru
        _
      %p106 = scmp.lt.s32.totalorder %s15, 2
      // Predicated region
      $region17: #{tpu_custom_call.1} parent=5 // pred_check
        %p107 = pneg %p106
      $region18: #{tpu_custom_call.1} parent=5 // pred_check_branch
        %109 = sbr.rel (%p107) target = $region20
      $region19: #{tpu_custom_call.1} parent=5 // pred_region
        // Predicated region
        $region21: #{tpu_custom_call.1} parent=19 // pred_check
          %p110 = pneg %p56
        $region22: #{tpu_custom_call.1} parent=19 // pred_check_branch
          %112 = sbr.rel (%p110) target = $region24
        $region23: #{tpu_custom_call.1} parent=19 // pred_region
          %s113 = sand.u32 %s46, 1
          %s114 = scalar_lea.sflag [#allocation4], %s113
          %s115 = sand.u32 %s46, 1
          %s116 = smul.addr %s115, 8
          %s117 = scalar_lea.vmem [#allocation3], %s116
          %s119 = ssub.s32 128, 128
          %120 = vsyncadd %s114, %s119
          %s121 = smul.addr %s15, 2
          %s122 = smul.addr %s121, 64
          %s123 = scalar_lea.hbm %s1, %s122
          %s125 = sshll.u32 %s117, 4
          %s126 = int_to_ptr.vmem [resolvable:$true] %s125
          %128 = dma.hbm_to_vmem [thread:$0]  %s123, 128, %s126, %s114
        $region24: #{tpu_custom_call.1} parent=19 // pred_fallthru
          _
      $region20: #{tpu_custom_call.1} parent=5 // pred_fallthru
        _
      %p129 = scmp.le.s32.totalorder 1, %s15
      %p130 = scmp.lt.s32.totalorder %s15, 3
      %p131 = pnand %p129, %p130
      %p132 = pneg %p131
      // Predicated region
      $region25: #{tpu_custom_call.1} parent=5 // pred_check
        _
      $region26: #{tpu_custom_call.1} parent=5 // pred_check_branch
        %134 = sbr.rel (%p131) target = $region28
      $region27: #{tpu_custom_call.1} parent=5 // pred_region
        %s135 = ssub.s32 %s15, 1
        %s136 = sand.u32 %s49, 1
        %s137 = scalar_lea.sflag [#allocation4], %s136
        %s138 = sand.u32 %s49, 1
        %s139 = smul.addr %s138, 8
        %s140 = scalar_lea.vmem [#allocation3], %s139
        // Predicated region
        $region29: #{tpu_custom_call.1} parent=27 // pred_check
          %p141 = pneg %p62
        $region30: #{tpu_custom_call.1} parent=27 // pred_check_branch
          %143 = sbr.rel (%p141) target = $region32
        $region31: #{tpu_custom_call.1} parent=27 // pred_region
          %144 = dma.done %s137, 128
        $region32: #{tpu_custom_call.1} parent=27 // pred_fallthru
          _
        %p145 = pneg %p36
        %p146 = pneg %p33
        %s147 = sand.u32 %s49, 1
        %s148 = scalar_lea.sflag [#allocation4], %s147
        %s149 = sand.u32 %s49, 1
        %s150 = smul.addr %s149, 8
        %s151 = scalar_lea.vmem [#allocation3], %s150
        %p152 = pneg %p62
        %p153 = pneg %p59
        %p154 = pneg %p88
        %p155 = pneg %p85
        %s156 = sand.u32 %s75, 1
        %s157 = scalar_lea.sflag [#allocation5], %s156
        %s158 = sand.u32 %s75, 1
        %s159 = smul.addr %s158, 8
        %s160 = scalar_lea.vmem [#allocation6], %s159
        %v161 = vld [vmem:[%s140] sm:$0xff]
        %v163 = vcombine.high %v161, %v161
        %165 = vmatprep.subr.mxu0 %v163
        %166 = vmatpush1.xpose.msra.mxu0 %v161
        %167 = vmatprep.subr.mxu0 0.0
        %168 = vmatpush1.xpose.msra.mxu0 0.0
        %169 = vmatprep.subr.mxu0 0.0
        %170 = vmatpush1.xpose.msra.mxu0 0.0
        %171 = vmatprep.subr.mxu0 0.0
        %172 = vmatpush1.xpose.msra.mxu0 0.0
        %173 = vmatprep.subr.mxu0 0.0
        %174 = vmatpush1.xpose.msra.mxu0 0.0
        %175 = vmatprep.subr.mxu0 0.0
        %176 = vmatpush1.xpose.msra.mxu0 0.0
        %177 = vmatprep.subr.mxu0 0.0
        %178 = vmatpush1.xpose.msra.mxu0 0.0
        %179 = vmatprep.subr.mxu0 0.0
        %180 = vmatpush1.xpose.msra.mxu0 0.0
        %181 = vmatprep.subr.mxu0 0.0
        %182 = vmatpush1.xpose.msra.mxu0 0.0
        %183 = vmatprep.subr.mxu0 0.0
        %184 = vmatpush1.xpose.msra.mxu0 0.0
        %185 = vmatprep.subr.mxu0 0.0
        %186 = vmatpush1.xpose.msra.mxu0 0.0
        %187 = vmatprep.subr.mxu0 0.0
        %188 = vmatpush1.xpose.msra.mxu0 0.0
        %189 = vmatprep.subr.mxu0 0.0
        %190 = vmatpush1.xpose.msra.mxu0 0.0
        %191 = vmatprep.subr.mxu0 0.0
        %192 = vmatpush1.xpose.msra.mxu0 0.0
        %193 = vmatprep.subr.mxu0 0.0
        %194 = vmatpush1.xpose.msra.mxu0 0.0
        %195 = vmatprep.subr.mxu0 0.0
        %196 = vmatpush1.xpose.msra.mxu0 0.0
        %197 = vmatprep.subr.mxu0 0.0
        %198 = vmatpush1.xpose.msra.mxu0 0.0
        %199 = vmatprep.subr.mxu0 0.0
        %200 = vmatpush1.xpose.msra.mxu0 0.0
        %201 = vmatprep.subr.mxu0 0.0
        %202 = vmatpush1.xpose.msra.mxu0 0.0
        %203 = vmatprep.subr.mxu0 0.0
        %204 = vmatpush1.xpose.msra.mxu0 0.0
        %205 = vmatprep.subr.mxu0 0.0
        %206 = vmatpush1.xpose.msra.mxu0 0.0
        %207 = vmatprep.subr.mxu0 0.0
        %208 = vmatpush1.xpose.msra.mxu0 0.0
        %209 = vmatprep.subr.mxu0 0.0
        %210 = vmatpush1.xpose.msra.mxu0 0.0
        %211 = vmatprep.subr.mxu0 0.0
        %212 = vmatpush1.xpose.msra.mxu0 0.0
        %213 = vmatprep.subr.mxu0 0.0
        %214 = vmatpush1.xpose.msra.mxu0 0.0
        %215 = vmatprep.subr.mxu0 0.0
        %216 = vmatpush1.xpose.msra.mxu0 0.0
        %217 = vmatprep.subr.mxu0 0.0
        %218 = vmatpush1.xpose.msra.mxu0 0.0
        %219 = vmatprep.subr.mxu0 0.0
        %220 = vmatpush1.xpose.msra.mxu0 0.0
        %221 = vmatprep.subr.mxu0 0.0
        %222 = vmatpush1.xpose.msra.mxu0 0.0
        %223 = vmatprep.subr.mxu0 0.0
        %224 = vmatpush1.xpose.msra.mxu0 0.0
        %225 = vmatprep.subr.mxu0 0.0
        %226 = vmatpush1.xpose.msra.mxu0 0.0
        %227 = vmatprep.subr.mxu0 0.0
        %228 = vmatpush1.xpose.msra.mxu0 0.0
        %229 = vmatprep.mubr.f32.mxu0 %v163
        %230 = vmatmul.mubr.f32.gmra.mrb[0].mxu0 %v161
        %v231 = vpop.f32.mrb[0].mxu0
        %v232 = vadd.f32 0.0, %v231
        %v233 = vpop.f32.mrb[0].mxu0
        %234 = vdwg.mxu0
        %vm235 = vcmask 27648
        %v236 = vsel %vm235, %v232, inf
        %237 = vmin.xlane.f32.xlu0 %v236
        %v238 = vpop.xlane.xlu0 %237
        %v239 = vsub.f32 %v238, %v232
        %v240 = vmul.f32 %v239, 1.442695
        %v241 = vpow.pop %v240
        %v242 = vsel %vm235, %v241, 0.0
        %243 = vadd.xlane.f32.xlu0 %v242
        %v244 = vpop.xlane.xlu0 %243
        %v245 = vrcp.pop %v244
        %v246 = vmul.f32 %v241, %v245
        %vm247 = vcmask 31744
        %v249 = vsel %vm247, %v246, 0
        %vm251 = vcmask 1043456
        %v252 = vsel %vm251, %v161, 0
        %v254 = vsel %vm251, %v163, 0
        %256 = vmatprep.subr.mxu0 %v254
        %257 = vmatpush1.msra.mxu0 %v252
        %258 = vmatprep.subr.mxu0 0.0
        %259 = vmatpush1.msra.mxu0 0.0
        %260 = vmatprep.subr.mxu0 0.0
        %261 = vmatpush1.msra.mxu0 0.0
        %262 = vmatprep.subr.mxu0 0.0
        %263 = vmatpush1.msra.mxu0 0.0
        %264 = vmatprep.subr.mxu0 0.0
        %265 = vmatpush1.msra.mxu0 0.0
        %266 = vmatprep.subr.mxu0 0.0
        %267 = vmatpush1.msra.mxu0 0.0
        %268 = vmatprep.subr.mxu0 0.0
        %269 = vmatpush1.msra.mxu0 0.0
        %270 = vmatprep.subr.mxu0 0.0
        %271 = vmatpush1.msra.mxu0 0.0
        %272 = vmatprep.subr.mxu0 0.0
        %273 = vmatpush1.msra.mxu0 0.0
        %274 = vmatprep.subr.mxu0 0.0
        %275 = vmatpush1.msra.mxu0 0.0
        %276 = vmatprep.subr.mxu0 0.0
        %277 = vmatpush1.msra.mxu0 0.0
        %278 = vmatprep.subr.mxu0 0.0
        %279 = vmatpush1.msra.mxu0 0.0
        %280 = vmatprep.subr.mxu0 0.0
        %281 = vmatpush1.msra.mxu0 0.0
        %282 = vmatprep.subr.mxu0 0.0
        %283 = vmatpush1.msra.mxu0 0.0
        %284 = vmatprep.subr.mxu0 0.0
        %285 = vmatpush1.msra.mxu0 0.0
        %286 = vmatprep.subr.mxu0 0.0
        %287 = vmatpush1.msra.mxu0 0.0
        %288 = vmatprep.subr.mxu0 0.0
        %289 = vmatpush1.msra.mxu0 0.0
        %290 = vmatprep.subr.mxu0 0.0
        %291 = vmatpush1.msra.mxu0 0.0
        %292 = vmatprep.subr.mxu0 0.0
        %293 = vmatpush1.msra.mxu0 0.0
        %294 = vmatprep.subr.mxu0 0.0
        %295 = vmatpush1.msra.mxu0 0.0
        %296 = vmatprep.subr.mxu0 0.0
        %297 = vmatpush1.msra.mxu0 0.0
        %298 = vmatprep.subr.mxu0 0.0
        %299 = vmatpush1.msra.mxu0 0.0
        %300 = vmatprep.subr.mxu0 0.0
        %301 = vmatpush1.msra.mxu0 0.0
        %302 = vmatprep.subr.mxu0 0.0
        %303 = vmatpush1.msra.mxu0 0.0
        %304 = vmatprep.subr.mxu0 0.0
        %305 = vmatpush1.msra.mxu0 0.0
        %306 = vmatprep.subr.mxu0 0.0
        %307 = vmatpush1.msra.mxu0 0.0
        %308 = vmatprep.subr.mxu0 0.0
        %309 = vmatpush1.msra.mxu0 0.0
        %310 = vmatprep.subr.mxu0 0.0
        %311 = vmatpush1.msra.mxu0 0.0
        %312 = vmatprep.subr.mxu0 0.0
        %313 = vmatpush1.msra.mxu0 0.0
        %314 = vmatprep.subr.mxu0 0.0
        %315 = vmatpush1.msra.mxu0 0.0
        %316 = vmatprep.subr.mxu0 0.0
        %317 = vmatpush1.msra.mxu0 0.0
        %318 = vmatprep.subr.mxu0 0.0
        %319 = vmatpush1.msra.mxu0 0.0
        %320 = vmatprep.mubr.f32.mxu0 0.0
        %321 = vmatmul.mubr.f32.gmra.mrb[0].mxu0 %v249
        %v322 = vpop.f32.mrb[0].mxu0
        %v323 = vadd.f32 0.0, %v322
        %v324 = vpop.f32.mrb[0].mxu0
        %v325 = vadd.f32 0.0, %v324
        %326 = vdwg.mxu0
        %s327 = sld [smem:[#allocation2]]
        %v328 = vstv %s327
        %v329 = vmul.f32 %v328, %v323
        %v330 = vmul.f32 %v328, %v325
        %v331 = vadd.f32 %v329, %v161
        %v332 = vadd.f32 %v330, %v163
        %v335 = vcombine.low %v331, %v332
        %337 = vst [vmem:[%s160] sm:$0xff] %v335
        %s338 = sand.u32 %s75, 1
        %s339 = scalar_lea.sflag [#allocation5], %s338
        %s340 = sand.u32 %s75, 1
        %s341 = smul.addr %s340, 8
        %s342 = scalar_lea.vmem [#allocation6], %s341
        // Predicated region
        $region33: #{tpu_custom_call.1} parent=27 // pred_check
          %p343 = pneg %p85
        $region34: #{tpu_custom_call.1} parent=27 // pred_check_branch
          %345 = sbr.rel (%p343) target = $region36
        $region35: #{tpu_custom_call.1} parent=27 // pred_region
          %s347 = ssub.s32 128, 128
          %348 = vsyncadd %s339, %s347
          %s349 = smul.addr %s20, 2
          %s350 = smul.addr %s349, 64
          %s351 = scalar_lea.hbm %s2, %s350
          %s353 = sshll.u32 %s342, 4
          %s354 = int_to_ptr.vmem [resolvable:$true] %s353
          %356 = dma.vmem_to_hbm [thread:$0]  %s354, 128, %s351, %s339
        $region36: #{tpu_custom_call.1} parent=27 // pred_fallthru
          _
      $region28: #{tpu_custom_call.1} parent=5 // pred_fallthru
        _
      %p357 = scmp.le.s32.totalorder 2, %s15
      // Predicated region
      $region37: #{tpu_custom_call.1} parent=5 // pred_check
        %p358 = pneg %p357
      $region38: #{tpu_custom_call.1} parent=5 // pred_check_branch
        %360 = sbr.rel (%p358) target = $region40
      $region39: #{tpu_custom_call.1} parent=5 // pred_region
        %s361 = ssub.s32 %s15, 2
        // Predicated region
        $region41: #{tpu_custom_call.1} parent=39 // pred_check
          %p362 = pneg %p91
        $region42: #{tpu_custom_call.1} parent=39 // pred_check_branch
          %364 = sbr.rel (%p362) target = $region44
        $region43: #{tpu_custom_call.1} parent=39 // pred_region
          %s365 = sand.u32 %s76, 1
          %s366 = scalar_lea.sflag [#allocation5], %s365
          %s367 = sand.u32 %s76, 1
          %s368 = smul.addr %s367, 8
          %s369 = scalar_lea.vmem [#allocation6], %s368
          %370 = dma.done %s366, 128
        $region44: #{tpu_custom_call.1} parent=39 // pred_fallthru
          _
      $region40: #{tpu_custom_call.1} parent=5 // pred_fallthru
        _
    $region6: #{tpu_custom_call.1} parent=1 // loop_footer
      %s19 = sadd.s32 1, %s15
    $region7: #{tpu_custom_call.1} parent=1 // loop_footer_branch
      %14 = sbr.rel target = $region3
    $region8: #{tpu_custom_call.1} parent=1 // loop_exit
      _
    %371 = vsyncpa [#allocation4], 1
    %s372 = scalar_lea.sflag [#allocation4], 1
    %373 = vsyncpa %s372, 1
    %374 = vsyncpa [#allocation5], 1
    %s375 = scalar_lea.sflag [#allocation5], 1
    %376 = vsyncpa %s375, 1

</llo_original>
